<compile_context>
chip_gen: v5e
topology: v5e:2x2
jax: 0.10.0
libtpu: 0.0.40
codegen_flags: <defaults>
</compile_context>

<pallas_src>
import jax
import jax.numpy as jnp
from jax.experimental import pallas as pl
from jax.experimental.pallas import tpu as pltpu


def _linear_kernel(x_ref, w_ref, o_ref):
    # x_ref: (tm, K) f32, w_ref: (K, N) bf16 (pre-transposed, lane-dense last
    # dim), o_ref: (tm, N) f32.  Cast x to the weight dtype on the VPU, feed
    # the MXU in its native bf16, accumulate in f32.
    x = x_ref[...].astype(w_ref.dtype)
    o_ref[...] = jnp.dot(
        x, w_ref[...], preferred_element_type=jnp.float32
    ).astype(o_ref.dtype)


def prepare_weight(weight_nk, dtype=jnp.bfloat16):
    """One-time prep of a torch.nn.Linear weight (N, K) -> MXU-canonical (K, N).

    Do this once at init and keep the result resident; the transpose + bf16
    cast are then amortized across every forward call (a per-call cast would
    add its own HBM pass and cancel the bandwidth win).
    """
    return jnp.asarray(weight_nk.T, dtype=dtype)


def linear_no_bias(x, w_kn, *, tm=None):
    """y = x @ W.T for torch Linear, with W pre-prepared as w_kn = W.T (K, N)."""
    M, K = x.shape
    K2, N = w_kn.shape
    assert K == K2, "prepared weight must be (K, N)"

    if tm is None:
        # Single tile when the whole batch fits; otherwise 512-row tiles:
        # multiple of the MXU row dim, amortizes ~0.35us per-grid-step
        # overhead, and yields a parallel grid axis >= 2 so v7x's second
        # TensorCore has work.  VMEM stays tiny (<~2 MB) on all generations.
        tm = M if M <= 512 else 512
    num_m = pl.cdiv(M, tm)  # ragged last block OK: partial output stores masked

    cost = pl.CostEstimate(
        flops=2 * M * N * K,
        bytes_accessed=(
            M * K * x.dtype.itemsize
            + K * N * w_kn.dtype.itemsize
            + M * N * x.dtype.itemsize
        ),
        transcendentals=0,
    )

    return pl.pallas_call(
        _linear_kernel,
        out_shape=jax.ShapeDtypeStruct((M, N), x.dtype),
        grid=(num_m,),
        in_specs=[
            pl.BlockSpec((tm, K), lambda i: (i, 0)),   # x tile marches over M
            pl.BlockSpec((K, N), lambda i: (0, 0),     # weight stays VMEM-resident,
                         pipeline_mode=pl.Buffered(1)),  # single-buffered (constant idx)
        ],
        out_specs=pl.BlockSpec((tm, N), lambda i: (i, 0)),
        compiler_params=pltpu.CompilerParams(
            dimension_semantics=("parallel",),
        ),
        cost_estimate=cost,
    )(x, w_kn)


if __name__ == "__main__":
    K, N, M = 256, 128, 32

    key = jax.random.PRNGKey(0)
    kx, kw = jax.random.split(key)

    # Deterministic synthetic inputs; torch.nn.Linear-like init, weight (N, K).
    x = jax.random.uniform(kx, (M, K), dtype=jnp.float32)
    bound = 1.0 / (K ** 0.5)
    weight_nk = jax.random.uniform(
        kw, (N, K), dtype=jnp.float32, minval=-bound, maxval=bound
    )

    # One-time weight prep (transpose + bf16 storage), amortized across calls.
    w_kn = prepare_weight(weight_nk)

    y = linear_no_bias(x, w_kn)
    jax.block_until_ready(y)

    # Reference with matching operand dtypes (bf16 operands, f32 accumulate).
    y_ref = jnp.dot(
        x.astype(jnp.bfloat16), w_kn, preferred_element_type=jnp.float32
    )
    assert y.shape == (M, N)
    assert jnp.allclose(y, y_ref, atol=1e-2, rtol=1e-2), float(
        jnp.max(jnp.abs(y - y_ref))
    )

    print("KERNEL_OK")
</pallas_src>

<mosaic_0001>
module attributes {stable_mosaic.version = 11 : i64} {
  func.func @_linear_kernel(%arg0: i32, %arg1: memref<32x256xf32, #tpu.memory_space<vmem>>, %arg2: memref<256x128xbf16, #tpu.memory_space<vmem>>, %arg3: memref<32x128xf32, #tpu.memory_space<vmem>>) attributes {dimension_semantics = [#tpu.dimension_semantics<parallel>], iteration_bounds = array<i64: 1>, scalar_prefetch = 0 : i64, scratch_operands = 0 : i64, tpu.core_type = #tpu.core_type<tc>, window_params = [{transform_indices = @transform_0, window_bounds = array<i64: 32, 256>}, {pipeline_mode = #tpu.pipeline_mode<synchronous>, transform_indices = @transform_1, window_bounds = array<i64: 256, 128>}, {transform_indices = @transform_2, window_bounds = array<i64: 32, 128>}]} {
    %c0 = arith.constant 0 : index
    %c0_0 = arith.constant 0 : index
    %0 = vector.load %arg1[%c0, %c0_0] : memref<32x256xf32, #tpu.memory_space<vmem>>, vector<32x256xf32>
    %1 = arith.truncf %0 : vector<32x256xf32> to vector<32x256xbf16>
    %c0_1 = arith.constant 0 : index
    %c0_2 = arith.constant 0 : index
    %2 = vector.load %arg2[%c0_1, %c0_2] : memref<256x128xbf16, #tpu.memory_space<vmem>>, vector<256x128xbf16>
    %cst = arith.constant dense<0.000000e+00> : vector<32x128xf32>
    %3 = tpu.matmul %1, %2, %cst {dimension_numbers = #tpu.dot_dimension_numbers<[1], [0], [0], [1], [0, 0, 1, 1], [], []>} : vector<32x256xbf16>, vector<256x128xbf16>, vector<32x128xf32> -> vector<32x128xf32>
    %c0_3 = arith.constant 0 : index
    %c0_4 = arith.constant 0 : index
    %4 = vector.load %arg3[%c0_3, %c0_4] : memref<32x128xf32, #tpu.memory_space<vmem>>, vector<32x128xf32>
    tpu.vector_store %arg3[%c0_3, %c0_4], %3 {strides = array<i32>} : memref<32x128xf32, #tpu.memory_space<vmem>>, vector<32x128xf32>,
    return
  }
  func.func @transform_0(%arg0: i32) -> (i32, i32) {
    %c0_i32 = arith.constant 0 : i32
    %c0_i32_0 = arith.constant 0 : i32
    return %arg0, %c0_i32 : i32, i32
  }
  func.func @transform_1(%arg0: i32) -> (i32, i32) {
    %c0_i32 = arith.constant 0 : i32
    %c0_i32_0 = arith.constant 0 : i32
    %c0_i32_1 = arith.constant 0 : i32
    return %c0_i32, %c0_i32_0 : i32, i32
  }
  func.func @transform_2(%arg0: i32) -> (i32, i32) {
    %c0_i32 = arith.constant 0 : i32
    %c0_i32_0 = arith.constant 0 : i32
    return %arg0, %c0_i32 : i32, i32
  }
}

</mosaic_0001>

<llo_original>
// kernel: tpu_custom_call.1
$region0: #{tpu_custom_call.1}
  #allocation0 [shape = 'u32[]', space=smem, size = 0x4, offset = 0x4, fixed_abs, tag = 'smem constant byte address 0x4 - core index']
  #allocation1 [shape = 'u32[72,128]{1,0:T(1,128)}', space=vmem, size = 0x9000, scoped, tag = 'internal scratch']
  %s0 = inlined_call_operand.hbm [shape: f32[32,256], index: 0, kind: input, shape index: {}]
  %s1 = inlined_call_operand.hbm [shape: bf16[256,128], index: 1, kind: input, shape index: {}]
  %s2 = inlined_call_operand.hbm [shape: f32[32,128], index: 2, kind: output, shape index: {}]
  %s3 = sld [smem:[#allocation0]]
  $region26: #{tpu_custom_call.1} parent=0
    _
  %s5 = ssub.s32 1, %s3
  %s6 = scalar_select 0, %s5, %s3
  $region1: #{tpu_custom_call.1} parent=0
    #allocation2 [shape = 'u8[32768]{0}', space=vmem, size = 0x8000, scoped, tag = 'input window, operand 0, single buffered']
    #allocation3 [shape = 's32[1]{0}', space=sflag, size = 0x4, scoped, tag = 'scoped memory for tpu_custom_call.1']
    #allocation4 [shape = 's32[1]{0}', space=sflag, size = 0x4, scoped, tag = 'scoped memory for tpu_custom_call.1']
    #allocation5 [shape = 'u8[65536]{0}', space=vmem, size = 0x10000, scoped, tag = 'input window, operand 1, single buffered']
    #allocation6 [shape = 's32[1]{0}', space=sflag, size = 0x4, scoped, tag = 'scoped memory for tpu_custom_call.1']
    #allocation7 [shape = 'u8[16384]{0}', space=vmem, size = 0x4000, scoped, tag = 'output window, operand 0, single buffered']
    %7 = vsyncpa [#allocation3], 0
    %8 = vsyncpa [#allocation6], 0
    %9 = vsyncpa [#allocation4], 0
    // Predicated region
    $region2: #{tpu_custom_call.1} parent=1 // pred_check
      _
    $region3: #{tpu_custom_call.1} parent=1 // pred_check_branch
      %11 = sbr.rel (0) target = $region5
    $region4: #{tpu_custom_call.1} parent=1 // pred_region
      %13 = vsyncadd [#allocation3], 0
      %s14 = sshll.u32 %s0, 4
      %s15 = int_to_ptr.hbm [resolvable:$true] %s14
      %s16 = sshll.u32 [#allocation2], 4
      %s17 = int_to_ptr.vmem [resolvable:$true] %s16
      %22 = dma.hbm_to_vmem [thread:$0]  %s15, 1024, %s17, [#allocation3], 256, 256, 16
    $region5: #{tpu_custom_call.1} parent=1 // pred_fallthru
      _
    // Predicated region
    $region6: #{tpu_custom_call.1} parent=1 // pred_check
      _
    $region7: #{tpu_custom_call.1} parent=1 // pred_check_branch
      %24 = sbr.rel (0) target = $region9
    $region8: #{tpu_custom_call.1} parent=1 // pred_region
      %26 = vsyncadd [#allocation6], 0
      %s27 = sshll.u32 %s1, 4
      %s28 = int_to_ptr.hbm [resolvable:$true] %s27
      %s29 = sshll.u32 [#allocation5], 4
      %s30 = int_to_ptr.vmem [resolvable:$true] %s29
      %35 = dma.hbm_to_vmem [thread:$0]  %s28, 2048, %s30, [#allocation6], 64, 64, 4
    $region9: #{tpu_custom_call.1} parent=1 // pred_fallthru
      _
    // Predicated region
    $region10: #{tpu_custom_call.1} parent=1 // pred_check
      _
    $region11: #{tpu_custom_call.1} parent=1 // pred_check_branch
      %37 = sbr.rel (0) target = $region13
    $region12: #{tpu_custom_call.1} parent=1 // pred_region
      %39 = dma.done [#allocation3], 1024
    $region13: #{tpu_custom_call.1} parent=1 // pred_fallthru
      _
    // Predicated region
    $region14: #{tpu_custom_call.1} parent=1 // pred_check
      _
    $region15: #{tpu_custom_call.1} parent=1 // pred_check_branch
      %41 = sbr.rel (0) target = $region17
    $region16: #{tpu_custom_call.1} parent=1 // pred_region
      %43 = dma.done [#allocation6], 2048
    $region17: #{tpu_custom_call.1} parent=1 // pred_fallthru
      _
    %v44 = vld [vmem:[#allocation2] sm:$0xff]
    %v45 = vld [vmem:[#allocation2 + $0x8] sm:$0xff]
    %v46 = vld [vmem:[#allocation2 + $0x10] sm:$0xff]
    %v47 = vld [vmem:[#allocation2 + $0x18] sm:$0xff]
    %v48 = vld [vmem:[#allocation2 + $0x20] sm:$0xff]
    %v49 = vld [vmem:[#allocation2 + $0x28] sm:$0xff]
    %v50 = vld [vmem:[#allocation2 + $0x30] sm:$0xff]
    %v51 = vld [vmem:[#allocation2 + $0x38] sm:$0xff]
    %v52 = vpack.c.bf16 %v46, %v44
    %v53 = vpack.c.bf16 %v47, %v45
    %v54 = vpack.c.bf16 %v50, %v48
    %v55 = vpack.c.bf16 %v51, %v49
    %v56 = vld [vmem:[#allocation5] sm:$0xf]
    %v57 = vld [vmem:[#allocation5 + $0x4] sm:$0xf]
    %v58 = vld [vmem:[#allocation5 + $0x8] sm:$0xf]
    %v59 = vld [vmem:[#allocation5 + $0xc] sm:$0xf]
    %v60 = vld [vmem:[#allocation5 + $0x10] sm:$0xf]
    %v61 = vld [vmem:[#allocation5 + $0x14] sm:$0xf]
    %v62 = vld [vmem:[#allocation5 + $0x18] sm:$0xf]
    %v63 = vld [vmem:[#allocation5 + $0x1c] sm:$0xf]
    %v64 = vld [vmem:[#allocation5 + $0x20] sm:$0xf]
    %v65 = vld [vmem:[#allocation5 + $0x24] sm:$0xf]
    %v66 = vld [vmem:[#allocation5 + $0x28] sm:$0xf]
    %v67 = vld [vmem:[#allocation5 + $0x2c] sm:$0xf]
    %v68 = vld [vmem:[#allocation5 + $0x30] sm:$0xf]
    %v69 = vld [vmem:[#allocation5 + $0x34] sm:$0xf]
    %v70 = vld [vmem:[#allocation5 + $0x38] sm:$0xf]
    %v71 = vld [vmem:[#allocation5 + $0x3c] sm:$0xf]
    %v72 = vld [vmem:[#allocation5 + $0x40] sm:$0xf]
    %v73 = vld [vmem:[#allocation5 + $0x44] sm:$0xf]
    %v74 = vld [vmem:[#allocation5 + $0x48] sm:$0xf]
    %v75 = vld [vmem:[#allocation5 + $0x4c] sm:$0xf]
    %v76 = vld [vmem:[#allocation5 + $0x50] sm:$0xf]
    %v77 = vld [vmem:[#allocation5 + $0x54] sm:$0xf]
    %v78 = vld [vmem:[#allocation5 + $0x58] sm:$0xf]
    %v79 = vld [vmem:[#allocation5 + $0x5c] sm:$0xf]
    %v80 = vld [vmem:[#allocation5 + $0x60] sm:$0xf]
    %v81 = vld [vmem:[#allocation5 + $0x64] sm:$0xf]
    %v82 = vld [vmem:[#allocation5 + $0x68] sm:$0xf]
    %v83 = vld [vmem:[#allocation5 + $0x6c] sm:$0xf]
    %v84 = vld [vmem:[#allocation5 + $0x70] sm:$0xf]
    %v85 = vld [vmem:[#allocation5 + $0x74] sm:$0xf]
    %v86 = vld [vmem:[#allocation5 + $0x78] sm:$0xf]
    %v87 = vld [vmem:[#allocation5 + $0x7c] sm:$0xf]
    %v120 = vunpack.c.l.b16 %v56
    %v121 = vunpack.c.l.b16 %v57
    %v122 = vunpack.c.l.b16 %v58
    %v123 = vunpack.c.l.b16 %v59
    %v124 = vunpack.c.l.b16 %v60
    %v125 = vunpack.c.l.b16 %v61
    %v126 = vunpack.c.l.b16 %v62
    %v127 = vunpack.c.l.b16 %v63
    %v128 = vunpack.c.l.b16 %v64
    %v129 = vunpack.c.l.b16 %v65
    %v130 = vunpack.c.l.b16 %v66
    %v131 = vunpack.c.l.b16 %v67
    %v132 = vunpack.c.l.b16 %v68
    %v133 = vunpack.c.l.b16 %v69
    %v134 = vunpack.c.l.b16 %v70
    %v135 = vunpack.c.l.b16 %v71
    %v136 = vunpack.c.l.b16 %v72
    %v137 = vunpack.c.l.b16 %v73
    %v138 = vunpack.c.l.b16 %v74
    %v139 = vunpack.c.l.b16 %v75
    %v140 = vunpack.c.l.b16 %v76
    %v141 = vunpack.c.l.b16 %v77
    %v142 = vunpack.c.l.b16 %v78
    %v143 = vunpack.c.l.b16 %v79
    %v144 = vunpack.c.l.b16 %v80
    %v145 = vunpack.c.l.b16 %v81
    %v146 = vunpack.c.l.b16 %v82
    %v147 = vunpack.c.l.b16 %v83
    %v148 = vunpack.c.l.b16 %v84
    %v149 = vunpack.c.l.b16 %v85
    %v150 = vunpack.c.l.b16 %v86
    %v151 = vunpack.c.l.b16 %v87
    %v152 = vpack.c.b16 %v121, %v120
    %v153 = vpack.c.b16 %v123, %v122
    %v154 = vpack.c.b16 %v125, %v124
    %v155 = vpack.c.b16 %v127, %v126
    %v156 = vpack.c.b16 %v129, %v128
    %v157 = vpack.c.b16 %v131, %v130
    %v158 = vpack.c.b16 %v133, %v132
    %v159 = vpack.c.b16 %v135, %v134
    %v160 = vpack.c.b16 %v137, %v136
    %v161 = vpack.c.b16 %v139, %v138
    %v162 = vpack.c.b16 %v141, %v140
    %v163 = vpack.c.b16 %v143, %v142
    %v164 = vpack.c.b16 %v145, %v144
    %v165 = vpack.c.b16 %v147, %v146
    %v166 = vpack.c.b16 %v149, %v148
    %v167 = vpack.c.b16 %v151, %v150
    %184 = vmatpush.bf16.msra.mxu0 %v159
    %185 = vmatpush.bf16.msra.mxu0 %v158
    %186 = vmatpush.bf16.msra.mxu0 %v157
    %187 = vmatpush.bf16.msra.mxu0 %v156
    %188 = vmatpush.bf16.msra.mxu0 %v155
    %189 = vmatpush.bf16.msra.mxu0 %v154
    %190 = vmatpush.bf16.msra.mxu0 %v153
    %191 = vmatpush.bf16.msra.mxu0 %v152
    %192 = vmatmul.bf16.gmra.mxu0 %v52
    %v193 = vpop.f32.mrf.mxu0
    %v194 = vadd.f32 0.0, %v193
    %v195 = vpop.f32.mrf.mxu0
    %v196 = vadd.f32 0.0, %v195
    %197 = vmatmul.bf16.gmra.mxu0 %v54
    %v198 = vpop.f32.mrf.mxu0
    %v199 = vadd.f32 0.0, %v198
    %v200 = vpop.f32.mrf.mxu0
    %v201 = vadd.f32 0.0, %v200
    %202 = vdwg.mxu0
    %203 = vmatpush.bf16.msra.mxu0 %v167
    %204 = vmatpush.bf16.msra.mxu0 %v166
    %205 = vmatpush.bf16.msra.mxu0 %v165
    %206 = vmatpush.bf16.msra.mxu0 %v164
    %207 = vmatpush.bf16.msra.mxu0 %v163
    %208 = vmatpush.bf16.msra.mxu0 %v162
    %209 = vmatpush.bf16.msra.mxu0 %v161
    %210 = vmatpush.bf16.msra.mxu0 %v160
    %211 = vmatmul.bf16.gmra.mxu0 %v53
    %v212 = vpop.f32.mrf.mxu0
    %v213 = vadd.f32 %v194, %v212
    %v214 = vpop.f32.mrf.mxu0
    %v215 = vadd.f32 %v196, %v214
    %216 = vmatmul.bf16.gmra.mxu0 %v55
    %v217 = vpop.f32.mrf.mxu0
    %v218 = vadd.f32 %v199, %v217
    %v219 = vpop.f32.mrf.mxu0
    %v220 = vadd.f32 %v201, %v219
    %221 = vdwg.mxu0
    %222 = vst [vmem:[#allocation7] sm:$0xff] %v213
    %223 = vst [vmem:[#allocation7 + $0x8] sm:$0xff] %v215
    %224 = vst [vmem:[#allocation7 + $0x10] sm:$0xff] %v218
    %225 = vst [vmem:[#allocation7 + $0x18] sm:$0xff] %v220
    // Predicated region
    $region18: #{tpu_custom_call.1} parent=1 // pred_check
      _
    $region19: #{tpu_custom_call.1} parent=1 // pred_check_branch
      %227 = sbr.rel (0) target = $region21
    $region20: #{tpu_custom_call.1} parent=1 // pred_region
      %229 = vsyncadd [#allocation4], 0
      %s230 = sshll.u32 [#allocation7], 4
      %s231 = int_to_ptr.vmem [resolvable:$true] %s230
      %s232 = sshll.u32 %s2, 4
      %s233 = int_to_ptr.hbm [resolvable:$true] %s232
      %238 = dma.vmem_to_hbm [thread:$0]  %s231, 512, %s233, [#allocation4], 128, 128, 8
    $region21: #{tpu_custom_call.1} parent=1 // pred_fallthru
      _
    // Predicated region
    $region22: #{tpu_custom_call.1} parent=1 // pred_check
      _
    $region23: #{tpu_custom_call.1} parent=1 // pred_check_branch
      %240 = sbr.rel (0) target = $region25
    $region24: #{tpu_custom_call.1} parent=1 // pred_region
      %242 = dma.done [#allocation4], 512
    $region25: #{tpu_custom_call.1} parent=1 // pred_fallthru
      _
    %243 = vsyncpa [#allocation3], 1
    %244 = vsyncpa [#allocation6], 1
    %245 = vsyncpa [#allocation4], 1

</llo_original>
